<compile_context>
chip_gen: v5e
topology: v5e:2x2
jax: 0.10.0
libtpu: 0.0.40
codegen_flags: <defaults>
</compile_context>

<pallas_src>
import jax
import jax.numpy as jnp
from jax.experimental import pallas as pl
from jax.experimental.pallas import tpu as pltpu


def _round_up(x, m):
    return ((x + m - 1) // m) * m


def _conv_gemm_kernel(x_ref, w_ref, o_ref):
    """One grid step = one M tile of the collapsed conv GEMM.

    x_ref : (TM, K_pad)    im2col rows for this tile (K = KH*KW*Cin, zero-padded)
    w_ref : (K_pad, N_pad) full weight matrix, VMEM-resident (constant index_map)
    o_ref : (TM, N_pad)    lane-dense output tile (N_pad multiple of 128)
    """
    o_ref[...] = jnp.dot(
        x_ref[...], w_ref[...], preferred_element_type=jnp.float32
    ).astype(o_ref.dtype)


def conv2d_pallas(x_nchw, w_oihw, stride):
    """Valid (no padding) 2D conv, no bias — matches nn.Conv2d(..., bias=False)."""
    N, Cin, H, W = x_nchw.shape
    Cout, Cin_w, KH, KW = w_oihw.shape
    assert Cin == Cin_w, "groups != 1 not supported"
    st = int(stride)
    OH = (H - KH) // st + 1
    OW = (W - KW) // st + 1
    KK = KH * KW
    M = N * OH * OW
    K = KK * Cin

    # ---- glue (plain JAX): NCHW -> NHWC, strided im2col patch extraction ----
    # TODO(synk): for large feature maps, extract patches inside the kernel
    # (overlapping-window DMA of raw image rows) to avoid the KH*KW HBM read
    # amplification of the materialized im2col tensor.
    x_nhwc = jnp.transpose(x_nchw, (0, 2, 3, 1))  # (N, H, W, Cin)
    taps = []
    for kh in range(KH):
        for kw in range(KW):
            taps.append(
                x_nhwc[:, kh: kh + st * (OH - 1) + 1: st,
                          kw: kw + st * (OW - 1) + 1: st, :]
            )
    # concat along channels -> (N, OH, OW, KK*Cin); flattened K-order = (kh, kw, cin)
    patches = jnp.concatenate(taps, axis=-1).reshape(M, K)

    # weight OIHW -> (KH, KW, Cin, Cout) -> (K, Cout), matching K-order
    w_mat = jnp.transpose(w_oihw, (2, 3, 1, 0)).reshape(K, Cout)

    # ---- pad to TPU-friendly shapes ----
    # M (sublane dim of LHS/out) -> multiple of the M tile (itself multiple of 8)
    # K (lane dim of LHS, sublane dim of RHS) -> multiple of 128
    # Cout (lane dim of output) -> multiple of 128 (unmasked, lane-dense stores)
    TM = min(512, _round_up(M, 8))
    M_pad = _round_up(M, TM)
    K_pad = _round_up(K, 128)
    N_pad = _round_up(Cout, 128)

    # NOTE: for MXU-scale channels on v6e/v7x, cast patches/w to bfloat16 here and
    # keep preferred_element_type=f32; kept f32 for exact parity with f32 reference.
    patches_p = jnp.pad(patches, ((0, M_pad - M), (0, K_pad - K)))
    w_p = jnp.pad(w_mat, ((0, K_pad - K), (0, N_pad - Cout)))

    grid_m = M_pad // TM

    flops = 2 * M_pad * K_pad * N_pad
    bytes_accessed = 4 * (M_pad * K_pad + K_pad * N_pad + M_pad * N_pad)

    out_p = pl.pallas_call(
        _conv_gemm_kernel,
        out_shape=jax.ShapeDtypeStruct((M_pad, N_pad), x_nchw.dtype),
        grid_spec=pltpu.PrefetchScalarGridSpec(
            num_scalar_prefetch=0,
            grid=(grid_m,),
            in_specs=[
                pl.BlockSpec((TM, K_pad), lambda i: (i, 0)),
                # constant block index -> weight DMA'd once, stays VMEM-resident
                pl.BlockSpec((K_pad, N_pad), lambda i: (0, 0)),
            ],
            out_specs=pl.BlockSpec((TM, N_pad), lambda i: (i, 0)),
        ),
        compiler_params=pltpu.CompilerParams(
            dimension_semantics=("parallel",),
        ),
        cost_estimate=pl.CostEstimate(
            flops=flops, transcendentals=0, bytes_accessed=bytes_accessed
        ),
    )(patches_p, w_p)

    # ---- glue: strip padding, back to NCHW ----
    out = out_p[:M, :Cout].reshape(N, OH, OW, Cout)
    return jnp.transpose(out, (0, 3, 1, 2))  # (N, Cout, OH, OW)


if __name__ == "__main__":
    # Module config (synthetic, deterministic): conv(ic=4, oc=8, ks=3, st=2)
    N, IC, H, W = 2, 4, 16, 16
    OC, KS, ST = 8, 3, 2

    key = jax.random.PRNGKey(0)
    kx, kw = jax.random.split(key)
    x = jax.random.normal(kx, (N, IC, H, W), dtype=jnp.float32)       # NCHW input
    # nn.Conv2d weight shape: (out_channels, in_channels, ks, ks)
    w = jax.random.normal(kw, (OC, IC, KS, KS), dtype=jnp.float32) * 0.1

    out = conv2d_pallas(x, w, ST)
    out = jax.block_until_ready(out)

    # Reference check against XLA's conv (same semantics as PyTorch Conv2d, bias=False)
    ref = jax.lax.conv_general_dilated(
        x, w, window_strides=(ST, ST), padding="VALID",
        dimension_numbers=("NCHW", "OIHW", "NCHW"),
    )
    assert out.shape == ref.shape, (out.shape, ref.shape)
    assert jnp.allclose(out, ref, rtol=1e-5, atol=1e-4), "mismatch vs reference conv"

    print("KERNEL_OK")
</pallas_src>

<mosaic_0001>
module attributes {stable_mosaic.version = 11 : i64} {
  func.func @_conv_gemm_kernel(%arg0: i32, %arg1: memref<104x128xf32, #tpu.memory_space<vmem>>, %arg2: memref<128x128xf32, #tpu.memory_space<vmem>>, %arg3: memref<104x128xf32, #tpu.memory_space<vmem>>) attributes {dimension_semantics = [#tpu.dimension_semantics<parallel>], iteration_bounds = array<i64: 1>, scalar_prefetch = 0 : i64, scratch_operands = 0 : i64, tpu.core_type = #tpu.core_type<tc>, window_params = [{transform_indices = @transform_0, window_bounds = array<i64: 104, 128>}, {pipeline_mode = #tpu.pipeline_mode<synchronous>, transform_indices = @transform_1, window_bounds = array<i64: 128, 128>}, {transform_indices = @transform_2, window_bounds = array<i64: 104, 128>}]} {
    %c0 = arith.constant 0 : index
    %c0_0 = arith.constant 0 : index
    %0 = vector.load %arg1[%c0, %c0_0] : memref<104x128xf32, #tpu.memory_space<vmem>>, vector<104x128xf32>
    %c0_1 = arith.constant 0 : index
    %c0_2 = arith.constant 0 : index
    %1 = vector.load %arg2[%c0_1, %c0_2] : memref<128x128xf32, #tpu.memory_space<vmem>>, vector<128x128xf32>
    %cst = arith.constant dense<0.000000e+00> : vector<104x128xf32>
    %2 = tpu.matmul %0, %1, %cst {dimension_numbers = #tpu.dot_dimension_numbers<[1], [0], [0], [1], [0, 0, 1, 1], [], []>} : vector<104x128xf32>, vector<128x128xf32>, vector<104x128xf32> -> vector<104x128xf32>
    %c0_3 = arith.constant 0 : index
    %c0_4 = arith.constant 0 : index
    %3 = vector.load %arg3[%c0_3, %c0_4] : memref<104x128xf32, #tpu.memory_space<vmem>>, vector<104x128xf32>
    tpu.vector_store %arg3[%c0_3, %c0_4], %2 {strides = array<i32>} : memref<104x128xf32, #tpu.memory_space<vmem>>, vector<104x128xf32>,
    return
  }
  func.func @transform_0(%arg0: i32) -> (i32, i32) {
    %c0_i32 = arith.constant 0 : i32
    %c0_i32_0 = arith.constant 0 : i32
    return %arg0, %c0_i32 : i32, i32
  }
  func.func @transform_1(%arg0: i32) -> (i32, i32) {
    %c0_i32 = arith.constant 0 : i32
    %c0_i32_0 = arith.constant 0 : i32
    %c0_i32_1 = arith.constant 0 : i32
    return %c0_i32, %c0_i32_0 : i32, i32
  }
  func.func @transform_2(%arg0: i32) -> (i32, i32) {
    %c0_i32 = arith.constant 0 : i32
    %c0_i32_0 = arith.constant 0 : i32
    return %arg0, %c0_i32 : i32, i32
  }
}

</mosaic_0001>

<llo_original>
// kernel: tpu_custom_call.1
$region0: #{tpu_custom_call.1}
  #allocation0 [shape = 'u32[]', space=smem, size = 0x4, offset = 0x4, fixed_abs, tag = 'smem constant byte address 0x4 - core index']
  #allocation1 [shape = 'u32[72,128]{1,0:T(1,128)}', space=vmem, size = 0x9000, scoped, tag = 'internal scratch']
  %s0 = inlined_call_operand.hbm [shape: f32[104,128], index: 0, kind: input, shape index: {}]
  %s1 = inlined_call_operand.hbm [shape: f32[128,128], index: 1, kind: input, shape index: {}]
  %s2 = inlined_call_operand.hbm [shape: f32[104,128], index: 2, kind: output, shape index: {}]
  %s3 = sld [smem:[#allocation0]]
  $region26: #{tpu_custom_call.1} parent=0
    _
  %s5 = ssub.s32 1, %s3
  %s6 = scalar_select 0, %s5, %s3
  $region1: #{tpu_custom_call.1} parent=0
    #allocation2 [shape = 'u8[53248]{0}', space=vmem, size = 0xd000, scoped, tag = 'input window, operand 0, single buffered']
    #allocation3 [shape = 's32[1]{0}', space=sflag, size = 0x4, scoped, tag = 'scoped memory for tpu_custom_call.1']
    #allocation4 [shape = 's32[1]{0}', space=sflag, size = 0x4, scoped, tag = 'scoped memory for tpu_custom_call.1']
    #allocation5 [shape = 'u8[65536]{0}', space=vmem, size = 0x10000, scoped, tag = 'input window, operand 1, single buffered']
    #allocation6 [shape = 's32[1]{0}', space=sflag, size = 0x4, scoped, tag = 'scoped memory for tpu_custom_call.1']
    #allocation7 [shape = 'u8[53248]{0}', space=vmem, size = 0xd000, scoped, tag = 'output window, operand 0, single buffered']
    %7 = vsyncpa [#allocation3], 0
    %8 = vsyncpa [#allocation6], 0
    %9 = vsyncpa [#allocation4], 0
    // Predicated region
    $region2: #{tpu_custom_call.1} parent=1 // pred_check
      _
    $region3: #{tpu_custom_call.1} parent=1 // pred_check_branch
      %11 = sbr.rel (0) target = $region5
    $region4: #{tpu_custom_call.1} parent=1 // pred_region
      %13 = vsyncadd [#allocation3], 0
      %s14 = sshll.u32 %s0, 4
      %s15 = int_to_ptr.hbm [resolvable:$true] %s14
      %s16 = sshll.u32 [#allocation2], 4
      %s17 = int_to_ptr.vmem [resolvable:$true] %s16
      %22 = dma.hbm_to_vmem [thread:$0]  %s15, 1664, %s17, [#allocation3], 128, 128, 8
    $region5: #{tpu_custom_call.1} parent=1 // pred_fallthru
      _
    // Predicated region
    $region6: #{tpu_custom_call.1} parent=1 // pred_check
      _
    $region7: #{tpu_custom_call.1} parent=1 // pred_check_branch
      %24 = sbr.rel (0) target = $region9
    $region8: #{tpu_custom_call.1} parent=1 // pred_region
      %26 = vsyncadd [#allocation6], 0
      %s27 = sshll.u32 %s1, 4
      %s28 = int_to_ptr.hbm [resolvable:$true] %s27
      %s29 = sshll.u32 [#allocation5], 4
      %s30 = int_to_ptr.vmem [resolvable:$true] %s29
      %35 = dma.hbm_to_vmem [thread:$0]  %s28, 2048, %s30, [#allocation6], 128, 128, 8
    $region9: #{tpu_custom_call.1} parent=1 // pred_fallthru
      _
    // Predicated region
    $region10: #{tpu_custom_call.1} parent=1 // pred_check
      _
    $region11: #{tpu_custom_call.1} parent=1 // pred_check_branch
      %37 = sbr.rel (0) target = $region13
    $region12: #{tpu_custom_call.1} parent=1 // pred_region
      %39 = dma.done [#allocation3], 1664
    $region13: #{tpu_custom_call.1} parent=1 // pred_fallthru
      _
    // Predicated region
    $region14: #{tpu_custom_call.1} parent=1 // pred_check
      _
    $region15: #{tpu_custom_call.1} parent=1 // pred_check_branch
      %41 = sbr.rel (0) target = $region17
    $region16: #{tpu_custom_call.1} parent=1 // pred_region
      %43 = dma.done [#allocation6], 2048
    $region17: #{tpu_custom_call.1} parent=1 // pred_fallthru
      _
    %v44 = vld [vmem:[#allocation2] sm:$0xff]
    %v45 = vld [vmem:[#allocation2 + $0x8] sm:$0xff]
    %v46 = vld [vmem:[#allocation2 + $0x10] sm:$0xff]
    %v47 = vld [vmem:[#allocation2 + $0x18] sm:$0xff]
    %v48 = vld [vmem:[#allocation2 + $0x20] sm:$0xff]
    %v49 = vld [vmem:[#allocation2 + $0x28] sm:$0xff]
    %v50 = vld [vmem:[#allocation2 + $0x30] sm:$0xff]
    %v51 = vld [vmem:[#allocation2 + $0x38] sm:$0xff]
    %v52 = vld [vmem:[#allocation2 + $0x40] sm:$0xff]
    %v53 = vld [vmem:[#allocation2 + $0x48] sm:$0xff]
    %v54 = vld [vmem:[#allocation2 + $0x50] sm:$0xff]
    %v55 = vld [vmem:[#allocation2 + $0x58] sm:$0xff]
    %v56 = vld [vmem:[#allocation2 + $0x60] sm:$0xff]
    %v57 = vld [vmem:[#allocation5] sm:$0xff]
    %v58 = vld [vmem:[#allocation5 + $0x8] sm:$0xff]
    %v59 = vld [vmem:[#allocation5 + $0x10] sm:$0xff]
    %v60 = vld [vmem:[#allocation5 + $0x18] sm:$0xff]
    %v61 = vld [vmem:[#allocation5 + $0x20] sm:$0xff]
    %v62 = vld [vmem:[#allocation5 + $0x28] sm:$0xff]
    %v63 = vld [vmem:[#allocation5 + $0x30] sm:$0xff]
    %v64 = vld [vmem:[#allocation5 + $0x38] sm:$0xff]
    %v65 = vld [vmem:[#allocation5 + $0x40] sm:$0xff]
    %v66 = vld [vmem:[#allocation5 + $0x48] sm:$0xff]
    %v67 = vld [vmem:[#allocation5 + $0x50] sm:$0xff]
    %v68 = vld [vmem:[#allocation5 + $0x58] sm:$0xff]
    %v69 = vld [vmem:[#allocation5 + $0x60] sm:$0xff]
    %v70 = vld [vmem:[#allocation5 + $0x68] sm:$0xff]
    %v71 = vld [vmem:[#allocation5 + $0x70] sm:$0xff]
    %v72 = vld [vmem:[#allocation5 + $0x78] sm:$0xff]
    %73 = vmatpush.msra.mxu0 %v72
    %74 = vmatpush.msra.mxu0 %v71
    %75 = vmatpush.msra.mxu0 %v70
    %76 = vmatpush.msra.mxu0 %v69
    %77 = vmatpush.msra.mxu0 %v68
    %78 = vmatpush.msra.mxu0 %v67
    %79 = vmatpush.msra.mxu0 %v66
    %80 = vmatpush.msra.mxu0 %v65
    %81 = vmatpush.msra.mxu0 %v64
    %82 = vmatpush.msra.mxu0 %v63
    %83 = vmatpush.msra.mxu0 %v62
    %84 = vmatpush.msra.mxu0 %v61
    %85 = vmatpush.msra.mxu0 %v60
    %86 = vmatpush.msra.mxu0 %v59
    %87 = vmatpush.msra.mxu0 %v58
    %88 = vmatpush.msra.mxu0 %v57
    %89 = vmatmul.f32.gmra.mxu0 %v44
    %v90 = vpop.f32.mrf.mxu0
    %v91 = vadd.f32 0.0, %v90
    %92 = vmatmul.f32.gmra.mxu0 %v45
    %v93 = vpop.f32.mrf.mxu0
    %v94 = vadd.f32 0.0, %v93
    %95 = vmatmul.f32.gmra.mxu0 %v46
    %v96 = vpop.f32.mrf.mxu0
    %v97 = vadd.f32 0.0, %v96
    %98 = vmatmul.f32.gmra.mxu0 %v47
    %v99 = vpop.f32.mrf.mxu0
    %v100 = vadd.f32 0.0, %v99
    %101 = vmatmul.f32.gmra.mxu0 %v48
    %v102 = vpop.f32.mrf.mxu0
    %v103 = vadd.f32 0.0, %v102
    %104 = vmatmul.f32.gmra.mxu0 %v49
    %v105 = vpop.f32.mrf.mxu0
    %v106 = vadd.f32 0.0, %v105
    %107 = vmatmul.f32.gmra.mxu0 %v50
    %v108 = vpop.f32.mrf.mxu0
    %v109 = vadd.f32 0.0, %v108
    %110 = vmatmul.f32.gmra.mxu0 %v51
    %v111 = vpop.f32.mrf.mxu0
    %v112 = vadd.f32 0.0, %v111
    %113 = vmatmul.f32.gmra.mxu0 %v52
    %v114 = vpop.f32.mrf.mxu0
    %v115 = vadd.f32 0.0, %v114
    %116 = vmatmul.f32.gmra.mxu0 %v53
    %v117 = vpop.f32.mrf.mxu0
    %v118 = vadd.f32 0.0, %v117
    %119 = vmatmul.f32.gmra.mxu0 %v54
    %v120 = vpop.f32.mrf.mxu0
    %v121 = vadd.f32 0.0, %v120
    %122 = vmatmul.f32.gmra.mxu0 %v55
    %v123 = vpop.f32.mrf.mxu0
    %v124 = vadd.f32 0.0, %v123
    %125 = vmatmul.f32.gmra.mxu0 %v56
    %v126 = vpop.f32.mrf.mxu0
    %v127 = vadd.f32 0.0, %v126
    %128 = vdwg.mxu0
    %129 = vst [vmem:[#allocation7] sm:$0xff] %v91
    %130 = vst [vmem:[#allocation7 + $0x8] sm:$0xff] %v94
    %131 = vst [vmem:[#allocation7 + $0x10] sm:$0xff] %v97
    %132 = vst [vmem:[#allocation7 + $0x18] sm:$0xff] %v100
    %133 = vst [vmem:[#allocation7 + $0x20] sm:$0xff] %v103
    %134 = vst [vmem:[#allocation7 + $0x28] sm:$0xff] %v106
    %135 = vst [vmem:[#allocation7 + $0x30] sm:$0xff] %v109
    %136 = vst [vmem:[#allocation7 + $0x38] sm:$0xff] %v112
    %137 = vst [vmem:[#allocation7 + $0x40] sm:$0xff] %v115
    %138 = vst [vmem:[#allocation7 + $0x48] sm:$0xff] %v118
    %139 = vst [vmem:[#allocation7 + $0x50] sm:$0xff] %v121
    %140 = vst [vmem:[#allocation7 + $0x58] sm:$0xff] %v124
    %141 = vst [vmem:[#allocation7 + $0x60] sm:$0xff] %v127
    // Predicated region
    $region18: #{tpu_custom_call.1} parent=1 // pred_check
      _
    $region19: #{tpu_custom_call.1} parent=1 // pred_check_branch
      %143 = sbr.rel (0) target = $region21
    $region20: #{tpu_custom_call.1} parent=1 // pred_region
      %145 = vsyncadd [#allocation4], 0
      %s146 = sshll.u32 [#allocation7], 4
      %s147 = int_to_ptr.vmem [resolvable:$true] %s146
      %s148 = sshll.u32 %s2, 4
      %s149 = int_to_ptr.hbm [resolvable:$true] %s148
      %154 = dma.vmem_to_hbm [thread:$0]  %s147, 1664, %s149, [#allocation4], 128, 128, 8
    $region21: #{tpu_custom_call.1} parent=1 // pred_fallthru
      _
    // Predicated region
    $region22: #{tpu_custom_call.1} parent=1 // pred_check
      _
    $region23: #{tpu_custom_call.1} parent=1 // pred_check_branch
      %156 = sbr.rel (0) target = $region25
    $region24: #{tpu_custom_call.1} parent=1 // pred_region
      %158 = dma.done [#allocation4], 1664
    $region25: #{tpu_custom_call.1} parent=1 // pred_fallthru
      _
    %159 = vsyncpa [#allocation3], 1
    %160 = vsyncpa [#allocation6], 1
    %161 = vsyncpa [#allocation4], 1

</llo_original>
